<compile_context>
chip_gen: v5e
topology: v5e:2x2
jax: 0.10.0
libtpu: 0.0.40
codegen_flags: <defaults>
</compile_context>

<pallas_src>
import jax
import jax.numpy as jnp
from jax import lax
from jax.experimental import pallas as pl
from jax.experimental.pallas import tpu as pltpu


def nnh10_kernel(x_ref, w1_ref, bias_ref, w2_ref, o_ref):
    # Static shapes: x (B, D); w1 (H, D); w2 (C, H); bias (16, 2); o (B, C).
    H = w1_ref.shape[0]
    C = w2_ref.shape[0]

    bias = bias_ref[...]                               # (16, 2): col 0 = b1, col 1 = b2

    # fc1, transposed: h^T = W1 @ x^T -> (H, B).  W1 already has K=D on lanes
    # (natural MXU LHS); Mosaic only has to transpose the smaller x operand.
    # Equivalent to (x @ W1.T + b1) of nn.Linear; D=4000 ragged-K tail is
    # masked by the dot_general lowering (do NOT hand-roll this contraction).
    h_t = lax.dot_general(w1_ref[...], x_ref[...], (((1,), (1,)), ((), ())),
                          preferred_element_type=jnp.float32)
    h_t = h_t + bias[:H, 0:1]                          # (H, 1) broadcast over batch lanes
    h_t = 1.0 / (1.0 + jnp.exp(-h_t))                  # exact sigmoid (exp on EUP)

    # out layer, still transposed: logits^T = W2 @ h^T -> (C, B).
    # K=H is on W2's lane axis and h^T's sublane axis -> no inserted transposes.
    logits_t = lax.dot_general(w2_ref[...], h_t, (((1,), (0,)), ((), ())),
                               preferred_element_type=jnp.float32)
    logits_t = logits_t + bias[:C, 1:2]                # (C, 1) broadcast over batch lanes

    # softmax over the class axis (axis 0 in the transposed layout); exact math.
    m = jnp.max(logits_t, axis=0, keepdims=True)
    e = jnp.exp(logits_t - m)
    probs_t = e / jnp.sum(e, axis=0, keepdims=True)    # (C, B)

    # Single tiny (C, B) -> (B, C) transpose at the very end.
    o_ref[...] = probs_t.T.astype(o_ref.dtype)


def pack_bias(b1, b2):
    """Pack b1/b2 into one column-oriented (rows, 2) f32 tile.

    Call ONCE at parameter-setup time (not per forward call): col 0 = b1,
    col 1 = b2, each padded with zeros to a sublane-aligned row count.
    """
    H = b1.shape[0]
    C = b2.shape[0]
    rows = max(8, ((max(H, C) + 7) // 8) * 8)
    bias = jnp.zeros((rows, 2), jnp.float32)
    bias = bias.at[:H, 0].set(b1.astype(jnp.float32))
    bias = bias.at[:C, 1].set(b2.astype(jnp.float32))
    return bias


def nnh10_forward(x, w1_t, bias_pack, w2_t):
    """x (B, D); w1_t (H, D) PyTorch layout; bias_pack from pack_bias(); w2_t (C, H)."""
    B, D = x.shape
    H = w1_t.shape[0]
    C = w2_t.shape[0]

    vmem = pl.BlockSpec(memory_space=pltpu.MemorySpace.VMEM)
    cost = pl.CostEstimate(
        flops=2 * B * D * H + 2 * B * H * C,
        transcendentals=B * H + B * C,
        bytes_accessed=4 * (B * D + H * D + C * H + bias_pack.size + B * C),
    )
    # No grid: single invocation, whole arrays resident in VMEM, no pipelining.
    # Do NOT add a K-reduction grid here: total input DMA (~0.3 MB) is cheaper
    # than one pipelined grid step's fixed overhead.
    # TODO(synk): if batch ever grows to >=512-1024 rows, add a "parallel"
    # batch grid axis (2nd TensorCore on v7x); pointless at B=8.
    return pl.pallas_call(
        nnh10_kernel,
        out_shape=jax.ShapeDtypeStruct((B, C), jnp.float32),
        in_specs=[vmem, vmem, vmem, vmem],
        out_specs=vmem,
        cost_estimate=cost,
    )(x, w1_t, bias_pack, w2_t)


def reference_forward(x, w1_t, b1, w2_t, b2):
    h = jax.nn.sigmoid(x @ w1_t.T + b1)
    logits = h @ w2_t.T + b2
    return jax.nn.softmax(logits, axis=-1)


if __name__ == "__main__":
    # Module defaults: input_size=4000, hidden_1=10, num_classes=2. Small batch.
    B, D, H, C = 8, 4000, 10, 2
    key = jax.random.PRNGKey(0)
    kx, k1, k2, k3, k4 = jax.random.split(key, 5)

    x = jax.random.normal(kx, (B, D), dtype=jnp.float32)

    # Deterministic PyTorch-like uniform(-1/sqrt(fan_in), 1/sqrt(fan_in)) init,
    # stored in PyTorch-native (out_features, in_features) layout.
    bound1 = 1.0 / (D ** 0.5)
    w1_t = jax.random.uniform(k1, (H, D), jnp.float32, -bound1, bound1)
    b1 = jax.random.uniform(k2, (H,), jnp.float32, -bound1, bound1)
    bound2 = 1.0 / (H ** 0.5)
    w2_t = jax.random.uniform(k3, (C, H), jnp.float32, -bound2, bound2)
    b2 = jax.random.uniform(k4, (C,), jnp.float32, -bound2, bound2)

    # One-time parameter prep (outside the per-call forward path).
    bias_pack = jax.block_until_ready(pack_bias(b1, b2))

    out = jax.block_until_ready(nnh10_forward(x, w1_t, bias_pack, w2_t))
    ref = reference_forward(x, w1_t, b1, w2_t, b2)

    assert out.shape == (B, C)
    assert jnp.allclose(out, ref, atol=1e-5, rtol=1e-5), "mismatch vs reference"
    assert jnp.allclose(jnp.sum(out, axis=-1), 1.0, atol=1e-5), "softmax rows must sum to 1"

    print("KERNEL_OK")
</pallas_src>

<mosaic_0001>
module attributes {stable_mosaic.version = 11 : i64} {
  func.func @nnh10_kernel(%arg0: memref<8x4000xf32, #tpu.memory_space<vmem>>, %arg1: memref<10x4000xf32, #tpu.memory_space<vmem>>, %arg2: memref<16x2xf32, #tpu.memory_space<vmem>>, %arg3: memref<2x10xf32, #tpu.memory_space<vmem>>, %arg4: memref<8x2xf32, #tpu.memory_space<vmem>>) attributes {dimension_semantics = [], scalar_prefetch = 0 : i64, scratch_operands = 0 : i64, tpu.core_type = #tpu.core_type<tc>} {
    %c0 = arith.constant 0 : index
    %c0_0 = arith.constant 0 : index
    %0 = vector.load %arg2[%c0, %c0_0] : memref<16x2xf32, #tpu.memory_space<vmem>>, vector<16x2xf32>
    %c0_1 = arith.constant 0 : index
    %c0_2 = arith.constant 0 : index
    %1 = vector.load %arg1[%c0_1, %c0_2] : memref<10x4000xf32, #tpu.memory_space<vmem>>, vector<10x4000xf32>
    %c0_3 = arith.constant 0 : index
    %c0_4 = arith.constant 0 : index
    %2 = vector.load %arg0[%c0_3, %c0_4] : memref<8x4000xf32, #tpu.memory_space<vmem>>, vector<8x4000xf32>
    %cst = arith.constant dense<0.000000e+00> : vector<10x8xf32>
    %3 = tpu.matmul %1, %2, %cst {dimension_numbers = #tpu.dot_dimension_numbers<[1], [1], [0], [0], [0, 0, 1, 0], [], []>} : vector<10x4000xf32>, vector<8x4000xf32>, vector<10x8xf32> -> vector<10x8xf32>
    %4 = vector.extract_strided_slice %0 {offsets = [0, 0], sizes = [10, 1], strides = [1, 1]} : vector<16x2xf32> to vector<10x1xf32>
    %5 = vector.broadcast %4 : vector<10x1xf32> to vector<10x8xf32>
    %6 = arith.addf %3, %5 : vector<10x8xf32>
    %cst_5 = arith.constant 0.000000e+00 : f32
    %7 = vector.broadcast %cst_5 : f32 to vector<10x8xf32>
    %8 = arith.subf %7, %6 : vector<10x8xf32>
    %9 = math.exp %8 : vector<10x8xf32>
    %cst_6 = arith.constant 1.000000e+00 : f32
    %10 = vector.broadcast %cst_6 : f32 to vector<10x8xf32>
    %11 = arith.addf %10, %9 : vector<10x8xf32>
    %cst_7 = arith.constant 1.000000e+00 : f32
    %12 = vector.broadcast %cst_7 : f32 to vector<10x8xf32>
    %13 = arith.divf %12, %11 : vector<10x8xf32>
    %c0_8 = arith.constant 0 : index
    %c0_9 = arith.constant 0 : index
    %14 = vector.load %arg3[%c0_8, %c0_9] : memref<2x10xf32, #tpu.memory_space<vmem>>, vector<2x10xf32>
    %cst_10 = arith.constant dense<0.000000e+00> : vector<2x8xf32>
    %15 = tpu.matmul %14, %13, %cst_10 {dimension_numbers = #tpu.dot_dimension_numbers<[1], [0], [0], [1], [0, 0, 1, 1], [], []>} : vector<2x10xf32>, vector<10x8xf32>, vector<2x8xf32> -> vector<2x8xf32>
    %16 = vector.extract_strided_slice %0 {offsets = [0, 1], sizes = [2, 1], strides = [1, 1]} : vector<16x2xf32> to vector<2x1xf32>
    %17 = vector.broadcast %16 : vector<2x1xf32> to vector<2x8xf32>
    %18 = arith.addf %15, %17 : vector<2x8xf32>
    %cst_11 = arith.constant dense<0xFF800000> : vector<8xf32>
    %19 = vector.multi_reduction <maximumf>, %18, %cst_11 [0] : vector<2x8xf32> to vector<8xf32>
    %20 = vector.shape_cast %19 : vector<8xf32> to vector<1x8xf32>
    %21 = vector.broadcast %20 : vector<1x8xf32> to vector<2x8xf32>
    %22 = arith.subf %18, %21 : vector<2x8xf32>
    %23 = math.exp %22 : vector<2x8xf32>
    %cst_12 = arith.constant dense<0.000000e+00> : vector<8xf32>
    %24 = vector.multi_reduction <add>, %23, %cst_12 [0] : vector<2x8xf32> to vector<8xf32>
    %25 = vector.shape_cast %24 : vector<8xf32> to vector<1x8xf32>
    %26 = vector.broadcast %25 : vector<1x8xf32> to vector<2x8xf32>
    %27 = arith.divf %23, %26 : vector<2x8xf32>
    %28 = tpu.transpose %27, [1, 0] : vector<2x8xf32> -> vector<8x2xf32>
    %c0_13 = arith.constant 0 : index
    %c0_14 = arith.constant 0 : index
    %29 = vector.load %arg4[%c0_13, %c0_14] : memref<8x2xf32, #tpu.memory_space<vmem>>, vector<8x2xf32>
    tpu.vector_store %arg4[%c0_13, %c0_14], %28 {strides = array<i32>} : memref<8x2xf32, #tpu.memory_space<vmem>>, vector<8x2xf32>,
    return
  }
}

</mosaic_0001>

<llo_original>
// kernel: tpu_custom_call.1
$region0: #{tpu_custom_call.1}
  #allocation0 [shape = 'u32[]', space=smem, size = 0x4, offset = 0x4, fixed_abs, tag = 'smem constant byte address 0x4 - core index']
  #allocation1 [shape = 'u32[72,128]{1,0:T(1,128)}', space=vmem, size = 0x9000, scoped, tag = 'internal scratch']
  %s0 = inlined_call_operand.hbm [shape: f32[8,4000], index: 0, kind: input, shape index: {}]
  %s1 = inlined_call_operand.hbm [shape: f32[10,4000], index: 1, kind: input, shape index: {}]
  %s2 = inlined_call_operand.vmem [shape: f32[16,2], index: 2, kind: input, shape index: {}]
  %s3 = inlined_call_operand.vmem [shape: f32[2,10], index: 3, kind: input, shape index: {}]
  %s4 = inlined_call_operand.vmem [shape: f32[8,2], index: 4, kind: output, shape index: {}]
  %s5 = sld [smem:[#allocation0]]
  $region34: #{tpu_custom_call.1} parent=0
    _
  %s7 = ssub.s32 1, %s5
  %s8 = scalar_select 0, %s7, %s5
  $region1: #{tpu_custom_call.1} parent=0
    #allocation2 [shape = 'u8[131072]{0}', space=vmem, size = 0x20000, scoped, tag = 'input window, operand 0, single buffered']
    #allocation3 [shape = 's32[1]{0}', space=sflag, size = 0x4, scoped, tag = 'scoped memory for tpu_custom_call.1']
    #allocation4 [shape = 'u8[262144]{0}', space=vmem, size = 0x40000, scoped, tag = 'input window, operand 1, single buffered']
    #allocation5 [shape = 's32[1]{0}', space=sflag, size = 0x4, scoped, tag = 'scoped memory for tpu_custom_call.1']
    %9 = vsyncpa [#allocation3], 0
    %10 = vsyncpa [#allocation5], 0
    // Predicated region
    $region2: #{tpu_custom_call.1} parent=1 // pred_check
      _
    $region3: #{tpu_custom_call.1} parent=1 // pred_check_branch
      %12 = sbr.rel (0) target = $region5
    $region4: #{tpu_custom_call.1} parent=1 // pred_region
      %14 = vsyncadd [#allocation3], 0
      %s16 = sshll.u32 %s0, 4
      %s17 = int_to_ptr.hbm [resolvable:$true] %s16
      %s18 = sshll.u32 [#allocation2], 4
      %s19 = int_to_ptr.vmem [resolvable:$true] %s18
      %21 = dma.hbm_to_vmem [thread:$0]  %s17, 4096, %s19, [#allocation3]
    $region5: #{tpu_custom_call.1} parent=1 // pred_fallthru
      _
    // Predicated region
    $region6: #{tpu_custom_call.1} parent=1 // pred_check
      _
    $region7: #{tpu_custom_call.1} parent=1 // pred_check_branch
      %23 = sbr.rel (0) target = $region9
    $region8: #{tpu_custom_call.1} parent=1 // pred_region
      %25 = vsyncadd [#allocation5], 0
      %s26 = sshll.u32 %s1, 4
      %s27 = int_to_ptr.hbm [resolvable:$true] %s26
      %s28 = sshll.u32 [#allocation4], 4
      %s29 = int_to_ptr.vmem [resolvable:$true] %s28
      %34 = dma.hbm_to_vmem [thread:$0]  %s27, 8192, %s29, [#allocation5], 4096, 4096, 256
    $region9: #{tpu_custom_call.1} parent=1 // pred_fallthru
      _
    // Predicated region
    $region10: #{tpu_custom_call.1} parent=1 // pred_check
      _
    $region11: #{tpu_custom_call.1} parent=1 // pred_check_branch
      %36 = sbr.rel (0) target = $region13
    $region12: #{tpu_custom_call.1} parent=1 // pred_region
      _
    $region13: #{tpu_custom_call.1} parent=1 // pred_fallthru
      _
    // Predicated region
    $region14: #{tpu_custom_call.1} parent=1 // pred_check
      _
    $region15: #{tpu_custom_call.1} parent=1 // pred_check_branch
      %38 = sbr.rel (0) target = $region17
    $region16: #{tpu_custom_call.1} parent=1 // pred_region
      _
    $region17: #{tpu_custom_call.1} parent=1 // pred_fallthru
      _
    // Predicated region
    $region18: #{tpu_custom_call.1} parent=1 // pred_check
      _
    $region19: #{tpu_custom_call.1} parent=1 // pred_check_branch
      %40 = sbr.rel (0) target = $region21
    $region20: #{tpu_custom_call.1} parent=1 // pred_region
      %42 = dma.done [#allocation3], 4096
    $region21: #{tpu_custom_call.1} parent=1 // pred_fallthru
      _
    // Predicated region
    $region22: #{tpu_custom_call.1} parent=1 // pred_check
      _
    $region23: #{tpu_custom_call.1} parent=1 // pred_check_branch
      %44 = sbr.rel (0) target = $region25
    $region24: #{tpu_custom_call.1} parent=1 // pred_region
      %46 = dma.done [#allocation5], 8192
    $region25: #{tpu_custom_call.1} parent=1 // pred_fallthru
      _
    %v47 = vld [vmem:[%s2] sm:$0xff]
    %v48 = vld [vmem:[%s2 + $0x8] sm:$0xff]
    %v49 = vld [vmem:[#allocation4] sm:$0xff]
    %v50 = vld [vmem:[#allocation4 + $0x8] sm:$0xff]
    %v51 = vld [vmem:[#allocation4 + $0x10] sm:$0xff]
    %v52 = vld [vmem:[#allocation4 + $0x18] sm:$0xff]
    %v53 = vld [vmem:[#allocation4 + $0x20] sm:$0xff]
    %v54 = vld [vmem:[#allocation4 + $0x28] sm:$0xff]
    %v55 = vld [vmem:[#allocation4 + $0x30] sm:$0xff]
    %v56 = vld [vmem:[#allocation4 + $0x38] sm:$0xff]
    %v57 = vld [vmem:[#allocation4 + $0x40] sm:$0xff]
    %v58 = vld [vmem:[#allocation4 + $0x48] sm:$0xff]
    %v59 = vld [vmem:[#allocation4 + $0x50] sm:$0xff]
    %v60 = vld [vmem:[#allocation4 + $0x58] sm:$0xff]
    %v61 = vld [vmem:[#allocation4 + $0x60] sm:$0xff]
    %v62 = vld [vmem:[#allocation4 + $0x68] sm:$0xff]
    %v63 = vld [vmem:[#allocation4 + $0x70] sm:$0xff]
    %v64 = vld [vmem:[#allocation4 + $0x78] sm:$0xff]
    %v65 = vld [vmem:[#allocation4 + $0x80] sm:$0xff]
    %v66 = vld [vmem:[#allocation4 + $0x88] sm:$0xff]
    %v67 = vld [vmem:[#allocation4 + $0x90] sm:$0xff]
    %v68 = vld [vmem:[#allocation4 + $0x98] sm:$0xff]
    %v69 = vld [vmem:[#allocation4 + $0xa0] sm:$0xff]
    %v70 = vld [vmem:[#allocation4 + $0xa8] sm:$0xff]
    %v71 = vld [vmem:[#allocation4 + $0xb0] sm:$0xff]
    %v72 = vld [vmem:[#allocation4 + $0xb8] sm:$0xff]
    %v73 = vld [vmem:[#allocation4 + $0xc0] sm:$0xff]
    %v74 = vld [vmem:[#allocation4 + $0xc8] sm:$0xff]
    %v75 = vld [vmem:[#allocation4 + $0xd0] sm:$0xff]
    %v76 = vld [vmem:[#allocation4 + $0xd8] sm:$0xff]
    %v77 = vld [vmem:[#allocation4 + $0xe0] sm:$0xff]
    %v78 = vld [vmem:[#allocation4 + $0xe8] sm:$0xff]
    %v79 = vld [vmem:[#allocation4 + $0xf0] sm:$0xff]
    %v80 = vld [vmem:[#allocation4 + $0xf8] sm:$0xff]
    %v81 = vld [vmem:[#allocation4 + $0x100] sm:$0x3]
    %v82 = vld [vmem:[#allocation4 + $0x108] sm:$0x3]
    %v83 = vld [vmem:[#allocation4 + $0x110] sm:$0x3]
    %v84 = vld [vmem:[#allocation4 + $0x118] sm:$0x3]
    %v85 = vld [vmem:[#allocation4 + $0x120] sm:$0x3]
    %v86 = vld [vmem:[#allocation4 + $0x128] sm:$0x3]
    %v87 = vld [vmem:[#allocation4 + $0x130] sm:$0x3]
    %v88 = vld [vmem:[#allocation4 + $0x138] sm:$0x3]
    %v89 = vld [vmem:[#allocation4 + $0x140] sm:$0x3]
    %v90 = vld [vmem:[#allocation4 + $0x148] sm:$0x3]
    %v91 = vld [vmem:[#allocation4 + $0x150] sm:$0x3]
    %v92 = vld [vmem:[#allocation4 + $0x158] sm:$0x3]
    %v93 = vld [vmem:[#allocation4 + $0x160] sm:$0x3]
    %v94 = vld [vmem:[#allocation4 + $0x168] sm:$0x3]
    %v95 = vld [vmem:[#allocation4 + $0x170] sm:$0x3]
    %v96 = vld [vmem:[#allocation4 + $0x178] sm:$0x3]
    %v97 = vld [vmem:[#allocation4 + $0x180] sm:$0x3]
    %v98 = vld [vmem:[#allocation4 + $0x188] sm:$0x3]
    %v99 = vld [vmem:[#allocation4 + $0x190] sm:$0x3]
    %v100 = vld [vmem:[#allocation4 + $0x198] sm:$0x3]
    %v101 = vld [vmem:[#allocation4 + $0x1a0] sm:$0x3]
    %v102 = vld [vmem:[#allocation4 + $0x1a8] sm:$0x3]
    %v103 = vld [vmem:[#allocation4 + $0x1b0] sm:$0x3]
    %v104 = vld [vmem:[#allocation4 + $0x1b8] sm:$0x3]
    %v105 = vld [vmem:[#allocation4 + $0x1c0] sm:$0x3]
    %v106 = vld [vmem:[#allocation4 + $0x1c8] sm:$0x3]
    %v107 = vld [vmem:[#allocation4 + $0x1d0] sm:$0x3]
    %v108 = vld [vmem:[#allocation4 + $0x1d8] sm:$0x3]
    %v109 = vld [vmem:[#allocation4 + $0x1e0] sm:$0x3]
    %v110 = vld [vmem:[#allocation4 + $0x1e8] sm:$0x3]
    %v111 = vld [vmem:[#allocation4 + $0x1f0] sm:$0x3]
    %v112 = vld [vmem:[#allocation4 + $0x1f8] sm:$0x3]
    %v113 = vld [vmem:[#allocation2] sm:$0xff]
    %v114 = vld [vmem:[#allocation2 + $0x8] sm:$0xff]
    %v115 = vld [vmem:[#allocation2 + $0x10] sm:$0xff]
    %v116 = vld [vmem:[#allocation2 + $0x18] sm:$0xff]
    %v117 = vld [vmem:[#allocation2 + $0x20] sm:$0xff]
    %v118 = vld [vmem:[#allocation2 + $0x28] sm:$0xff]
    %v119 = vld [vmem:[#allocation2 + $0x30] sm:$0xff]
    %v120 = vld [vmem:[#allocation2 + $0x38] sm:$0xff]
    %v121 = vld [vmem:[#allocation2 + $0x40] sm:$0xff]
    %v122 = vld [vmem:[#allocation2 + $0x48] sm:$0xff]
    %v123 = vld [vmem:[#allocation2 + $0x50] sm:$0xff]
    %v124 = vld [vmem:[#allocation2 + $0x58] sm:$0xff]
    %v125 = vld [vmem:[#allocation2 + $0x60] sm:$0xff]
    %v126 = vld [vmem:[#allocation2 + $0x68] sm:$0xff]
    %v127 = vld [vmem:[#allocation2 + $0x70] sm:$0xff]
    %v128 = vld [vmem:[#allocation2 + $0x78] sm:$0xff]
    %v129 = vld [vmem:[#allocation2 + $0x80] sm:$0xff]
    %v130 = vld [vmem:[#allocation2 + $0x88] sm:$0xff]
    %v131 = vld [vmem:[#allocation2 + $0x90] sm:$0xff]
    %v132 = vld [vmem:[#allocation2 + $0x98] sm:$0xff]
    %v133 = vld [vmem:[#allocation2 + $0xa0] sm:$0xff]
    %v134 = vld [vmem:[#allocation2 + $0xa8] sm:$0xff]
    %v135 = vld [vmem:[#allocation2 + $0xb0] sm:$0xff]
    %v136 = vld [vmem:[#allocation2 + $0xb8] sm:$0xff]
    %v137 = vld [vmem:[#allocation2 + $0xc0] sm:$0xff]
    %v138 = vld [vmem:[#allocation2 + $0xc8] sm:$0xff]
    %v139 = vld [vmem:[#allocation2 + $0xd0] sm:$0xff]
    %v140 = vld [vmem:[#allocation2 + $0xd8] sm:$0xff]
    %v141 = vld [vmem:[#allocation2 + $0xe0] sm:$0xff]
    %v142 = vld [vmem:[#allocation2 + $0xe8] sm:$0xff]
    %v143 = vld [vmem:[#allocation2 + $0xf0] sm:$0xff]
    %v144 = vld [vmem:[#allocation2 + $0xf8] sm:$0xff]
    %146 = vset.pattern.permute.xlu0 0
    %147 = vperm.xlu0 %146, %v47
    %v148 = vpop.permute.xlu0 %147
    %151 = vset.pattern.permute.xlu0 0
    %152 = vperm.xlu0 %151, %v48
    %v153 = vpop.permute.xlu0 %152
    %vm155 = vcmask 261120
    %v157 = vsel %vm155, %v80, 0
    %v160 = vsel %vm155, %v112, 0
    %v163 = vsel %vm155, %v144, 0
    %165 = vmatpush.xpose.msra.mxu0 0.0
    %166 = vmatpush.xpose.msra.mxu0 0.0
    %167 = vmatpush.xpose.msra.mxu0 0.0
    %168 = vmatpush.xpose.msra.mxu0 0.0
    %169 = vmatpush.xpose.msra.mxu0 0.0
    %170 = vmatpush.xpose.msra.mxu0 0.0
    %171 = vmatpush.xpose.msra.mxu0 0.0
    %172 = vmatpush.xpose.msra.mxu0 0.0
    %173 = vmatpush.xpose.msra.mxu0 0.0
    %174 = vmatpush.xpose.msra.mxu0 0.0
    %175 = vmatpush.xpose.msra.mxu0 0.0
    %176 = vmatpush.xpose.msra.mxu0 0.0
    %177 = vmatpush.xpose.msra.mxu0 0.0
    %178 = vmatpush.xpose.msra.mxu0 0.0
    %179 = vmatpush.xpose.msra.mxu0 0.0
    %180 = vmatpush.xpose.msra.mxu0 %v113
    %181 = vmatmul.f32.gmra.mxu0 %v49
    %v182 = vpop.f32.mrf.mxu0
    %v183 = vadd.f32 %v148, %v182
    %184 = vmatmul.f32.gmra.mxu0 %v81
    %v185 = vpop.f32.mrf.mxu0
    %v186 = vadd.f32 %v153, %v185
    %187 = vdwg.mxu0
    %188 = vmatpush.xpose.msra.mxu0 0.0
    %189 = vmatpush.xpose.msra.mxu0 0.0
    %190 = vmatpush.xpose.msra.mxu0 0.0
    %191 = vmatpush.xpose.msra.mxu0 0.0
    %192 = vmatpush.xpose.msra.mxu0 0.0
    %193 = vmatpush.xpose.msra.mxu0 0.0
    %194 = vmatpush.xpose.msra.mxu0 0.0
    %195 = vmatpush.xpose.msra.mxu0 0.0
    %196 = vmatpush.xpose.msra.mxu0 0.0
    %197 = vmatpush.xpose.msra.mxu0 0.0
    %198 = vmatpush.xpose.msra.mxu0 0.0
    %199 = vmatpush.xpose.msra.mxu0 0.0
    %200 = vmatpush.xpose.msra.mxu0 0.0
    %201 = vmatpush.xpose.msra.mxu0 0.0
    %202 = vmatpush.xpose.msra.mxu0 0.0
    %203 = vmatpush.xpose.msra.mxu0 %v114
    %204 = vmatmul.f32.gmra.mxu0 %v50
    %v205 = vpop.f32.mrf.mxu0
    %v206 = vadd.f32 %v183, %v205
    %207 = vmatmul.f32.gmra.mxu0 %v82
    %v208 = vpop.f32.mrf.mxu0
    %v209 = vadd.f32 %v186, %v208
    %210 = vdwg.mxu0
    %211 = vmatpush.xpose.msra.mxu0 0.0
    %212 = vmatpush.xpose.msra.mxu0 0.0
    %213 = vmatpush.xpose.msra.mxu0 0.0
    %214 = vmatpush.xpose.msra.mxu0 0.0
    %215 = vmatpush.xpose.msra.mxu0 0.0
    %216 = vmatpush.xpose.msra.mxu0 0.0
    %217 = vmatpush.xpose.msra.mxu0 0.0
    %218 = vmatpush.xpose.msra.mxu0 0.0
    %219 = vmatpush.xpose.msra.mxu0 0.0
    %220 = vmatpush.xpose.msra.mxu0 0.0
    %221 = vmatpush.xpose.msra.mxu0 0.0
    %222 = vmatpush.xpose.msra.mxu0 0.0
    %223 = vmatpush.xpose.msra.mxu0 0.0
    %224 = vmatpush.xpose.msra.mxu0 0.0
    %225 = vmatpush.xpose.msra.mxu0 0.0
    %226 = vmatpush.xpose.msra.mxu0 %v115
    %227 = vmatmul.f32.gmra.mxu0 %v51
    %v228 = vpop.f32.mrf.mxu0
    %v229 = vadd.f32 %v206, %v228
    %230 = vmatmul.f32.gmra.mxu0 %v83
    %v231 = vpop.f32.mrf.mxu0
    %v232 = vadd.f32 %v209, %v231
    %233 = vdwg.mxu0
    %234 = vmatpush.xpose.msra.mxu0 0.0
    %235 = vmatpush.xpose.msra.mxu0 0.0
    %236 = vmatpush.xpose.msra.mxu0 0.0
    %237 = vmatpush.xpose.msra.mxu0 0.0
    %238 = vmatpush.xpose.msra.mxu0 0.0
    %239 = vmatpush.xpose.msra.mxu0 0.0
    %240 = vmatpush.xpose.msra.mxu0 0.0
    %241 = vmatpush.xpose.msra.mxu0 0.0
    %242 = vmatpush.xpose.msra.mxu0 0.0
    %243 = vmatpush.xpose.msra.mxu0 0.0
    %244 = vmatpush.xpose.msra.mxu0 0.0
    %245 = vmatpush.xpose.msra.mxu0 0.0
    %246 = vmatpush.xpose.msra.mxu0 0.0
    %247 = vmatpush.xpose.msra.mxu0 0.0
    %248 = vmatpush.xpose.msra.mxu0 0.0
    %249 = vmatpush.xpose.msra.mxu0 %v116
    %250 = vmatmul.f32.gmra.mxu0 %v52
    %v251 = vpop.f32.mrf.mxu0
    %v252 = vadd.f32 %v229, %v251
    %253 = vmatmul.f32.gmra.mxu0 %v84
    %v254 = vpop.f32.mrf.mxu0
    %v255 = vadd.f32 %v232, %v254
    %256 = vdwg.mxu0
    %257 = vmatpush.xpose.msra.mxu0 0.0
    %258 = vmatpush.xpose.msra.mxu0 0.0
    %259 = vmatpush.xpose.msra.mxu0 0.0
    %260 = vmatpush.xpose.msra.mxu0 0.0
    %261 = vmatpush.xpose.msra.mxu0 0.0
    %262 = vmatpush.xpose.msra.mxu0 0.0
    %263 = vmatpush.xpose.msra.mxu0 0.0
    %264 = vmatpush.xpose.msra.mxu0 0.0
    %265 = vmatpush.xpose.msra.mxu0 0.0
    %266 = vmatpush.xpose.msra.mxu0 0.0
    %267 = vmatpush.xpose.msra.mxu0 0.0
    %268 = vmatpush.xpose.msra.mxu0 0.0
    %269 = vmatpush.xpose.msra.mxu0 0.0
    %270 = vmatpush.xpose.msra.mxu0 0.0
    %271 = vmatpush.xpose.msra.mxu0 0.0
    %272 = vmatpush.xpose.msra.mxu0 %v117
    %273 = vmatmul.f32.gmra.mxu0 %v53
    %v274 = vpop.f32.mrf.mxu0
    %v275 = vadd.f32 %v252, %v274
    %276 = vmatmul.f32.gmra.mxu0 %v85
    %v277 = vpop.f32.mrf.mxu0
    %v278 = vadd.f32 %v255, %v277
    %279 = vdwg.mxu0
    %280 = vmatpush.xpose.msra.mxu0 0.0
    %281 = vmatpush.xpose.msra.mxu0 0.0
    %282 = vmatpush.xpose.msra.mxu0 0.0
    %283 = vmatpush.xpose.msra.mxu0 0.0
    %284 = vmatpush.xpose.msra.mxu0 0.0
    %285 = vmatpush.xpose.msra.mxu0 0.0
    %286 = vmatpush.xpose.msra.mxu0 0.0
    %287 = vmatpush.xpose.msra.mxu0 0.0
    %288 = vmatpush.xpose.msra.mxu0 0.0
    %289 = vmatpush.xpose.msra.mxu0 0.0
    %290 = vmatpush.xpose.msra.mxu0 0.0
    %291 = vmatpush.xpose.msra.mxu0 0.0
    %292 = vmatpush.xpose.msra.mxu0 0.0
    %293 = vmatpush.xpose.msra.mxu0 0.0
    %294 = vmatpush.xpose.msra.mxu0 0.0
    %295 = vmatpush.xpose.msra.mxu0 %v118
    %296 = vmatmul.f32.gmra.mxu0 %v54
    %v297 = vpop.f32.mrf.mxu0
    %v298 = vadd.f32 %v275, %v297
    %299 = vmatmul.f32.gmra.mxu0 %v86
    %v300 = vpop.f32.mrf.mxu0
    %v301 = vadd.f32 %v278, %v300
    %302 = vdwg.mxu0
    %303 = vmatpush.xpose.msra.mxu0 0.0
    %304 = vmatpush.xpose.msra.mxu0 0.0
    %305 = vmatpush.xpose.msra.mxu0 0.0
    %306 = vmatpush.xpose.msra.mxu0 0.0
    %307 = vmatpush.xpose.msra.mxu0 0.0
    %308 = vmatpush.xpose.msra.mxu0 0.0
    %309 = vmatpush.xpose.msra.mxu0 0.0
    %310 = vmatpush.xpose.msra.mxu0 0.0
    %311 = vmatpush.xpose.msra.mxu0 0.0
    %312 = vmatpush.xpose.msra.mxu0 0.0
    %313 = vmatpush.xpose.msra.mxu0 0.0
    %314 = vmatpush.xpose.msra.mxu0 0.0
    %315 = vmatpush.xpose.msra.mxu0 0.0
    %316 = vmatpush.xpose.msra.mxu0 0.0
    %317 = vmatpush.xpose.msra.mxu0 0.0
    %318 = vmatpush.xpose.msra.mxu0 %v119
    %319 = vmatmul.f32.gmra.mxu0 %v55
    %v320 = vpop.f32.mrf.mxu0
    %v321 = vadd.f32 %v298, %v320
    %322 = vmatmul.f32.gmra.mxu0 %v87
    %v323 = vpop.f32.mrf.mxu0
    %v324 = vadd.f32 %v301, %v323
    %325 = vdwg.mxu0
    %326 = vmatpush.xpose.msra.mxu0 0.0
    %327 = vmatpush.xpose.msra.mxu0 0.0
    %328 = vmatpush.xpose.msra.mxu0 0.0
    %329 = vmatpush.xpose.msra.mxu0 0.0
    %330 = vmatpush.xpose.msra.mxu0 0.0
    %331 = vmatpush.xpose.msra.mxu0 0.0
    %332 = vmatpush.xpose.msra.mxu0 0.0
    %333 = vmatpush.xpose.msra.mxu0 0.0
    %334 = vmatpush.xpose.msra.mxu0 0.0
    %335 = vmatpush.xpose.msra.mxu0 0.0
    %336 = vmatpush.xpose.msra.mxu0 0.0
    %337 = vmatpush.xpose.msra.mxu0 0.0
    %338 = vmatpush.xpose.msra.mxu0 0.0
    %339 = vmatpush.xpose.msra.mxu0 0.0
    %340 = vmatpush.xpose.msra.mxu0 0.0
    %341 = vmatpush.xpose.msra.mxu0 %v120
    %342 = vmatmul.f32.gmra.mxu0 %v56
    %v343 = vpop.f32.mrf.mxu0
    %v344 = vadd.f32 %v321, %v343
    %345 = vmatmul.f32.gmra.mxu0 %v88
    %v346 = vpop.f32.mrf.mxu0
    %v347 = vadd.f32 %v324, %v346
    %348 = vdwg.mxu0
    %349 = vmatpush.xpose.msra.mxu0 0.0
    %350 = vmatpush.xpose.msra.mxu0 0.0
    %351 = vmatpush.xpose.msra.mxu0 0.0
    %352 = vmatpush.xpose.msra.mxu0 0.0
    %353 = vmatpush.xpose.msra.mxu0 0.0
    %354 = vmatpush.xpose.msra.mxu0 0.0
    %355 = vmatpush.xpose.msra.mxu0 0.0
    %356 = vmatpush.xpose.msra.mxu0 0.0
    %357 = vmatpush.xpose.msra.mxu0 0.0
    %358 = vmatpush.xpose.msra.mxu0 0.0
    %359 = vmatpush.xpose.msra.mxu0 0.0
    %360 = vmatpush.xpose.msra.mxu0 0.0
    %361 = vmatpush.xpose.msra.mxu0 0.0
    %362 = vmatpush.xpose.msra.mxu0 0.0
    %363 = vmatpush.xpose.msra.mxu0 0.0
    %364 = vmatpush.xpose.msra.mxu0 %v121
    %365 = vmatmul.f32.gmra.mxu0 %v57
    %v366 = vpop.f32.mrf.mxu0
    %v367 = vadd.f32 %v344, %v366
    %368 = vmatmul.f32.gmra.mxu0 %v89
    %v369 = vpop.f32.mrf.mxu0
    %v370 = vadd.f32 %v347, %v369
    %371 = vdwg.mxu0
    %372 = vmatpush.xpose.msra.mxu0 0.0
    %373 = vmatpush.xpose.msra.mxu0 0.0
    %374 = vmatpush.xpose.msra.mxu0 0.0
    %375 = vmatpush.xpose.msra.mxu0 0.0
    %376 = vmatpush.xpose.msra.mxu0 0.0
    %377 = vmatpush.xpose.msra.mxu0 0.0
    %378 = vmatpush.xpose.msra.mxu0 0.0
    %379 = vmatpush.xpose.msra.mxu0 0.0
    %380 = vmatpush.xpose.msra.mxu0 0.0
    %381 = vmatpush.xpose.msra.mxu0 0.0
    %382 = vmatpush.xpose.msra.mxu0 0.0
    %383 = vmatpush.xpose.msra.mxu0 0.0
    %384 = vmatpush.xpose.msra.mxu0 0.0
    %385 = vmatpush.xpose.msra.mxu0 0.0
    %386 = vmatpush.xpose.msra.mxu0 0.0
    %387 = vmatpush.xpose.msra.mxu0 %v122
    %388 = vmatmul.f32.gmra.mxu0 %v58
    %v389 = vpop.f32.mrf.mxu0
    %v390 = vadd.f32 %v367, %v389
    %391 = vmatmul.f32.gmra.mxu0 %v90
    %v392 = vpop.f32.mrf.mxu0
    %v393 = vadd.f32 %v370, %v392
    %394 = vdwg.mxu0
    %395 = vmatpush.xpose.msra.mxu0 0.0
    %396 = vmatpush.xpose.msra.mxu0 0.0
    %397 = vmatpush.xpose.msra.mxu0 0.0
    %398 = vmatpush.xpose.msra.mxu0 0.0
    %399 = vmatpush.xpose.msra.mxu0 0.0
    %400 = vmatpush.xpose.msra.mxu0 0.0
    %401 = vmatpush.xpose.msra.mxu0 0.0
    %402 = vmatpush.xpose.msra.mxu0 0.0
    %403 = vmatpush.xpose.msra.mxu0 0.0
    %404 = vmatpush.xpose.msra.mxu0 0.0
    %405 = vmatpush.xpose.msra.mxu0 0.0
    %406 = vmatpush.xpose.msra.mxu0 0.0
    %407 = vmatpush.xpose.msra.mxu0 0.0
    %408 = vmatpush.xpose.msra.mxu0 0.0
    %409 = vmatpush.xpose.msra.mxu0 0.0
    %410 = vmatpush.xpose.msra.mxu0 %v123
    %411 = vmatmul.f32.gmra.mxu0 %v59
    %v412 = vpop.f32.mrf.mxu0
    %v413 = vadd.f32 %v390, %v412
    %414 = vmatmul.f32.gmra.mxu0 %v91
    %v415 = vpop.f32.mrf.mxu0
    %v416 = vadd.f32 %v393, %v415
    %417 = vdwg.mxu0
    %418 = vmatpush.xpose.msra.mxu0 0.0
    %419 = vmatpush.xpose.msra.mxu0 0.0
    %420 = vmatpush.xpose.msra.mxu0 0.0
    %421 = vmatpush.xpose.msra.mxu0 0.0
    %422 = vmatpush.xpose.msra.mxu0 0.0
    %423 = vmatpush.xpose.msra.mxu0 0.0
    %424 = vmatpush.xpose.msra.mxu0 0.0
    %425 = vmatpush.xpose.msra.mxu0 0.0
    %426 = vmatpush.xpose.msra.mxu0 0.0
    %427 = vmatpush.xpose.msra.mxu0 0.0
    %428 = vmatpush.xpose.msra.mxu0 0.0
    %429 = vmatpush.xpose.msra.mxu0 0.0
    %430 = vmatpush.xpose.msra.mxu0 0.0
    %431 = vmatpush.xpose.msra.mxu0 0.0
    %432 = vmatpush.xpose.msra.mxu0 0.0
    %433 = vmatpush.xpose.msra.mxu0 %v124
    %434 = vmatmul.f32.gmra.mxu0 %v60
    %v435 = vpop.f32.mrf.mxu0
    %v436 = vadd.f32 %v413, %v435
    %437 = vmatmul.f32.gmra.mxu0 %v92
    %v438 = vpop.f32.mrf.mxu0
    %v439 = vadd.f32 %v416, %v438
    %440 = vdwg.mxu0
    %441 = vmatpush.xpose.msra.mxu0 0.0
    %442 = vmatpush.xpose.msra.mxu0 0.0
    %443 = vmatpush.xpose.msra.mxu0 0.0
    %444 = vmatpush.xpose.msra.mxu0 0.0
    %445 = vmatpush.xpose.msra.mxu0 0.0
    %446 = vmatpush.xpose.msra.mxu0 0.0
    %447 = vmatpush.xpose.msra.mxu0 0.0
    %448 = vmatpush.xpose.msra.mxu0 0.0
    %449 = vmatpush.xpose.msra.mxu0 0.0
    %450 = vmatpush.xpose.msra.mxu0 0.0
    %451 = vmatpush.xpose.msra.mxu0 0.0
    %452 = vmatpush.xpose.msra.mxu0 0.0
    %453 = vmatpush.xpose.msra.mxu0 0.0
    %454 = vmatpush.xpose.msra.mxu0 0.0
    %455 = vmatpush.xpose.msra.mxu0 0.0
    %456 = vmatpush.xpose.msra.mxu0 %v125
    %457 = vmatmul.f32.gmra.mxu0 %v61
    %v458 = vpop.f32.mrf.mxu0
    %v459 = vadd.f32 %v436, %v458
    %460 = vmatmul.f32.gmra.mxu0 %v93
    %v461 = vpop.f32.mrf.mxu0
    %v462 = vadd.f32 %v439, %v461
    %463 = vdwg.mxu0
    %464 = vmatpush.xpose.msra.mxu0 0.0
    %465 = vmatpush.xpose.msra.mxu0 0.0
    %466 = vmatpush.xpose.msra.mxu0 0.0
    %467 = vmatpush.xpose.msra.mxu0 0.0
    %468 = vmatpush.xpose.msra.mxu0 0.0
    %469 = vmatpush.xpose.msra.mxu0 0.0
    %470 = vmatpush.xpose.msra.mxu0 0.0
    %471 = vmatpush.xpose.msra.mxu0 0.0
    %472 = vmatpush.xpose.msra.mxu0 0.0
    %473 = vmatpush.xpose.msra.mxu0 0.0
    %474 = vmatpush.xpose.msra.mxu0 0.0
    %475 = vmatpush.xpose.msra.mxu0 0.0
    %476 = vmatpush.xpose.msra.mxu0 0.0
    %477 = vmatpush.xpose.msra.mxu0 0.0
    %478 = vmatpush.xpose.msra.mxu0 0.0
    %479 = vmatpush.xpose.msra.mxu0 %v126
    %480 = vmatmul.f32.gmra.mxu0 %v62
    %v481 = vpop.f32.mrf.mxu0
    %v482 = vadd.f32 %v459, %v481
    %483 = vmatmul.f32.gmra.mxu0 %v94
    %v484 = vpop.f32.mrf.mxu0
    %v485 = vadd.f32 %v462, %v484
    %486 = vdwg.mxu0
    %487 = vmatpush.xpose.msra.mxu0 0.0
    %488 = vmatpush.xpose.msra.mxu0 0.0
    %489 = vmatpush.xpose.msra.mxu0 0.0
    %490 = vmatpush.xpose.msra.mxu0 0.0
    %491 = vmatpush.xpose.msra.mxu0 0.0
    %492 = vmatpush.xpose.msra.mxu0 0.0
    %493 = vmatpush.xpose.msra.mxu0 0.0
    %494 = vmatpush.xpose.msra.mxu0 0.0
    %495 = vmatpush.xpose.msra.mxu0 0.0
    %496 = vmatpush.xpose.msra.mxu0 0.0
    %497 = vmatpush.xpose.msra.mxu0 0.0
    %498 = vmatpush.xpose.msra.mxu0 0.0
    %499 = vmatpush.xpose.msra.mxu0 0.0
    %500 = vmatpush.xpose.msra.mxu0 0.0
    %501 = vmatpush.xpose.msra.mxu0 0.0
    %502 = vmatpush.xpose.msra.mxu0 %v127
    %503 = vmatmul.f32.gmra.mxu0 %v63
    %v504 = vpop.f32.mrf.mxu0
    %v505 = vadd.f32 %v482, %v504
    %506 = vmatmul.f32.gmra.mxu0 %v95
    %v507 = vpop.f32.mrf.mxu0
    %v508 = vadd.f32 %v485, %v507
    %509 = vdwg.mxu0
    %510 = vmatpush.xpose.msra.mxu0 0.0
    %511 = vmatpush.xpose.msra.mxu0 0.0
    %512 = vmatpush.xpose.msra.mxu0 0.0
    %513 = vmatpush.xpose.msra.mxu0 0.0
    %514 = vmatpush.xpose.msra.mxu0 0.0
    %515 = vmatpush.xpose.msra.mxu0 0.0
    %516 = vmatpush.xpose.msra.mxu0 0.0
    %517 = vmatpush.xpose.msra.mxu0 0.0
    %518 = vmatpush.xpose.msra.mxu0 0.0
    %519 = vmatpush.xpose.msra.mxu0 0.0
    %520 = vmatpush.xpose.msra.mxu0 0.0
    %521 = vmatpush.xpose.msra.mxu0 0.0
    %522 = vmatpush.xpose.msra.mxu0 0.0
    %523 = vmatpush.xpose.msra.mxu0 0.0
    %524 = vmatpush.xpose.msra.mxu0 0.0
    %525 = vmatpush.xpose.msra.mxu0 %v128
    %526 = vmatmul.f32.gmra.mxu0 %v64
    %v527 = vpop.f32.mrf.mxu0
    %v528 = vadd.f32 %v505, %v527
    %529 = vmatmul.f32.gmra.mxu0 %v96
    %v530 = vpop.f32.mrf.mxu0
    %v531 = vadd.f32 %v508, %v530
    %532 = vdwg.mxu0
    %533 = vmatpush.xpose.msra.mxu0 0.0
    %534 = vmatpush.xpose.msra.mxu0 0.0
    %535 = vmatpush.xpose.msra.mxu0 0.0
    %536 = vmatpush.xpose.msra.mxu0 0.0
    %537 = vmatpush.xpose.msra.mxu0 0.0
    %538 = vmatpush.xpose.msra.mxu0 0.0
    %539 = vmatpush.xpose.msra.mxu0 0.0
    %540 = vmatpush.xpose.msra.mxu0 0.0
    %541 = vmatpush.xpose.msra.mxu0 0.0
    %542 = vmatpush.xpose.msra.mxu0 0.0
    %543 = vmatpush.xpose.msra.mxu0 0.0
    %544 = vmatpush.xpose.msra.mxu0 0.0
    %545 = vmatpush.xpose.msra.mxu0 0.0
    %546 = vmatpush.xpose.msra.mxu0 0.0
    %547 = vmatpush.xpose.msra.mxu0 0.0
    %548 = vmatpush.xpose.msra.mxu0 %v129
    %549 = vmatmul.f32.gmra.mxu0 %v65
    %v550 = vpop.f32.mrf.mxu0
    %v551 = vadd.f32 %v528, %v550
    %552 = vmatmul.f32.gmra.mxu0 %v97
    %v553 = vpop.f32.mrf.mxu0
    %v554 = vadd.f32 %v531, %v553
    %555 = vdwg.mxu0
    %556 = vmatpush.xpose.msra.mxu0 0.0
    %557 = vmatpush.xpose.msra.mxu0 0.0
    %558 = vmatpush.xpose.msra.mxu0 0.0
    %559 = vmatpush.xpose.msra.mxu0 0.0
    %560 = vmatpush.xpose.msra.mxu0 0.0
    %561 = vmatpush.xpose.msra.mxu0 0.0
    %562 = vmatpush.xpose.msra.mxu0 0.0
    %563 = vmatpush.xpose.msra.mxu0 0.0
    %564 = vmatpush.xpose.msra.mxu0 0.0
    %565 = vmatpush.xpose.msra.mxu0 0.0
    %566 = vmatpush.xpose.msra.mxu0 0.0
    %567 = vmatpush.xpose.msra.mxu0 0.0
    %568 = vmatpush.xpose.msra.mxu0 0.0
    %569 = vmatpush.xpose.msra.mxu0 0.0
    %570 = vmatpush.xpose.msra.mxu0 0.0
    %571 = vmatpush.xpose.msra.mxu0 %v130
    %572 = vmatmul.f32.gmra.mxu0 %v66
    %v573 = vpop.f32.mrf.mxu0
    %v574 = vadd.f32 %v551, %v573
    %575 = vmatmul.f32.gmra.mxu0 %v98
    %v576 = vpop.f32.mrf.mxu0
    %v577 = vadd.f32 %v554, %v576
    %578 = vdwg.mxu0
    %579 = vmatpush.xpose.msra.mxu0 0.0
    %580 = vmatpush.xpose.msra.mxu0 0.0
    %581 = vmatpush.xpose.msra.mxu0 0.0
    %582 = vmatpush.xpose.msra.mxu0 0.0
    %583 = vmatpush.xpose.msra.mxu0 0.0
    %584 = vmatpush.xpose.msra.mxu0 0.0
    %585 = vmatpush.xpose.msra.mxu0 0.0
    %586 = vmatpush.xpose.msra.mxu0 0.0
    %587 = vmatpush.xpose.msra.mxu0 0.0
    %588 = vmatpush.xpose.msra.mxu0 0.0
    %589 = vmatpush.xpose.msra.mxu0 0.0
    %590 = vmatpush.xpose.msra.mxu0 0.0
    %591 = vmatpush.xpose.msra.mxu0 0.0
    %592 = vmatpush.xpose.msra.mxu0 0.0
    %593 = vmatpush.xpose.msra.mxu0 0.0
    %594 = vmatpush.xpose.msra.mxu0 %v131
    %595 = vmatmul.f32.gmra.mxu0 %v67
    %v596 = vpop.f32.mrf.mxu0
    %v597 = vadd.f32 %v574, %v596
    %598 = vmatmul.f32.gmra.mxu0 %v99
    %v599 = vpop.f32.mrf.mxu0
    %v600 = vadd.f32 %v577, %v599
    %601 = vdwg.mxu0
    %602 = vmatpush.xpose.msra.mxu0 0.0
    %603 = vmatpush.xpose.msra.mxu0 0.0
    %604 = vmatpush.xpose.msra.mxu0 0.0
    %605 = vmatpush.xpose.msra.mxu0 0.0
    %606 = vmatpush.xpose.msra.mxu0 0.0
    %607 = vmatpush.xpose.msra.mxu0 0.0
    %608 = vmatpush.xpose.msra.mxu0 0.0
    %609 = vmatpush.xpose.msra.mxu0 0.0
    %610 = vmatpush.xpose.msra.mxu0 0.0
    %611 = vmatpush.xpose.msra.mxu0 0.0
    %612 = vmatpush.xpose.msra.mxu0 0.0
    %613 = vmatpush.xpose.msra.mxu0 0.0
    %614 = vmatpush.xpose.msra.mxu0 0.0
    %615 = vmatpush.xpose.msra.mxu0 0.0
    %616 = vmatpush.xpose.msra.mxu0 0.0
    %617 = vmatpush.xpose.msra.mxu0 %v132
    %618 = vmatmul.f32.gmra.mxu0 %v68
    %v619 = vpop.f32.mrf.mxu0
    %v620 = vadd.f32 %v597, %v619
    %621 = vmatmul.f32.gmra.mxu0 %v100
    %v622 = vpop.f32.mrf.mxu0
    %v623 = vadd.f32 %v600, %v622
    %624 = vdwg.mxu0
    %625 = vmatpush.xpose.msra.mxu0 0.0
    %626 = vmatpush.xpose.msra.mxu0 0.0
    %627 = vmatpush.xpose.msra.mxu0 0.0
    %628 = vmatpush.xpose.msra.mxu0 0.0
    %629 = vmatpush.xpose.msra.mxu0 0.0
    %630 = vmatpush.xpose.msra.mxu0 0.0
    %631 = vmatpush.xpose.msra.mxu0 0.0
    %632 = vmatpush.xpose.msra.mxu0 0.0
    %633 = vmatpush.xpose.msra.mxu0 0.0
    %634 = vmatpush.xpose.msra.mxu0 0.0
    %635 = vmatpush.xpose.msra.mxu0 0.0
    %636 = vmatpush.xpose.msra.mxu0 0.0
    %637 = vmatpush.xpose.msra.mxu0 0.0
    %638 = vmatpush.xpose.msra.mxu0 0.0
    %639 = vmatpush.xpose.msra.mxu0 0.0
    %640 = vmatpush.xpose.msra.mxu0 %v133
    %641 = vmatmul.f32.gmra.mxu0 %v69
    %v642 = vpop.f32.mrf.mxu0
    %v643 = vadd.f32 %v620, %v642
    %644 = vmatmul.f32.gmra.mxu0 %v101
    %v645 = vpop.f32.mrf.mxu0
    %v646 = vadd.f32 %v623, %v645
    %647 = vdwg.mxu0
    %648 = vmatpush.xpose.msra.mxu0 0.0
    %649 = vmatpush.xpose.msra.mxu0 0.0
    %650 = vmatpush.xpose.msra.mxu0 0.0
    %651 = vmatpush.xpose.msra.mxu0 0.0
    %652 = vmatpush.xpose.msra.mxu0 0.0
    %653 = vmatpush.xpose.msra.mxu0 0.0
    %654 = vmatpush.xpose.msra.mxu0 0.0
    %655 = vmatpush.xpose.msra.mxu0 0.0
    %656 = vmatpush.xpose.msra.mxu0 0.0
    %657 = vmatpush.xpose.msra.mxu0 0.0
    %658 = vmatpush.xpose.msra.mxu0 0.0
    %659 = vmatpush.xpose.msra.mxu0 0.0
    %660 = vmatpush.xpose.msra.mxu0 0.0
    %661 = vmatpush.xpose.msra.mxu0 0.0
    %662 = vmatpush.xpose.msra.mxu0 0.0
    %663 = vmatpush.xpose.msra.mxu0 %v134
    %664 = vmatmul.f32.gmra.mxu0 %v70
    %v665 = vpop.f32.mrf.mxu0
    %v666 = vadd.f32 %v643, %v665
    %667 = vmatmul.f32.gmra.mxu0 %v102
    %v668 = vpop.f32.mrf.mxu0
    %v669 = vadd.f32 %v646, %v668
    %670 = vdwg.mxu0
    %671 = vmatpush.xpose.msra.mxu0 0.0
    %672 = vmatpush.xpose.msra.mxu0 0.0
    %673 = vmatpush.xpose.msra.mxu0 0.0
    %674 = vmatpush.xpose.msra.mxu0 0.0
    %675 = vmatpush.xpose.msra.mxu0 0.0
    %676 = vmatpush.xpose.msra.mxu0 0.0
    %677 = vmatpush.xpose.msra.mxu0 0.0
    %678 = vmatpush.xpose.msra.mxu0 0.0
    %679 = vmatpush.xpose.msra.mxu0 0.0
    %680 = vmatpush.xpose.msra.mxu0 0.0
    %681 = vmatpush.xpose.msra.mxu0 0.0
    %682 = vmatpush.xpose.msra.mxu0 0.0
    %683 = vmatpush.xpose.msra.mxu0 0.0
    %684 = vmatpush.xpose.msra.mxu0 0.0
    %685 = vmatpush.xpose.msra.mxu0 0.0
    %686 = vmatpush.xpose.msra.mxu0 %v135
    %687 = vmatmul.f32.gmra.mxu0 %v71
    %v688 = vpop.f32.mrf.mxu0
    %v689 = vadd.f32 %v666, %v688
    %690 = vmatmul.f32.gmra.mxu0 %v103
    %v691 = vpop.f32.mrf.mxu0
    %v692 = vadd.f32 %v669, %v691
    %693 = vdwg.mxu0
    %694 = vmatpush.xpose.msra.mxu0 0.0
    %695 = vmatpush.xpose.msra.mxu0 0.0
    %696 = vmatpush.xpose.msra.mxu0 0.0
    %697 = vmatpush.xpose.msra.mxu0 0.0
    %698 = vmatpush.xpose.msra.mxu0 0.0
    %699 = vmatpush.xpose.msra.mxu0 0.0
    %700 = vmatpush.xpose.msra.mxu0 0.0
    %701 = vmatpush.xpose.msra.mxu0 0.0
    %702 = vmatpush.xpose.msra.mxu0 0.0
    %703 = vmatpush.xpose.msra.mxu0 0.0
    %704 = vmatpush.xpose.msra.mxu0 0.0
    %705 = vmatpush.xpose.msra.mxu0 0.0
    %706 = vmatpush.xpose.msra.mxu0 0.0
    %707 = vmatpush.xpose.msra.mxu0 0.0
    %708 = vmatpush.xpose.msra.mxu0 0.0
    %709 = vmatpush.xpose.msra.mxu0 %v136
    %710 = vmatmul.f32.gmra.mxu0 %v72
    %v711 = vpop.f32.mrf.mxu0
    %v712 = vadd.f32 %v689, %v711
    %713 = vmatmul.f32.gmra.mxu0 %v104
    %v714 = vpop.f32.mrf.mxu0
    %v715 = vadd.f32 %v692, %v714
    %716 = vdwg.mxu0
    %717 = vmatpush.xpose.msra.mxu0 0.0
    %718 = vmatpush.xpose.msra.mxu0 0.0
    %719 = vmatpush.xpose.msra.mxu0 0.0
    %720 = vmatpush.xpose.msra.mxu0 0.0
    %721 = vmatpush.xpose.msra.mxu0 0.0
    %722 = vmatpush.xpose.msra.mxu0 0.0
    %723 = vmatpush.xpose.msra.mxu0 0.0
    %724 = vmatpush.xpose.msra.mxu0 0.0
    %725 = vmatpush.xpose.msra.mxu0 0.0
    %726 = vmatpush.xpose.msra.mxu0 0.0
    %727 = vmatpush.xpose.msra.mxu0 0.0
    %728 = vmatpush.xpose.msra.mxu0 0.0
    %729 = vmatpush.xpose.msra.mxu0 0.0
    %730 = vmatpush.xpose.msra.mxu0 0.0
    %731 = vmatpush.xpose.msra.mxu0 0.0
    %732 = vmatpush.xpose.msra.mxu0 %v137
    %733 = vmatmul.f32.gmra.mxu0 %v73
    %v734 = vpop.f32.mrf.mxu0
    %v735 = vadd.f32 %v712, %v734
    %736 = vmatmul.f32.gmra.mxu0 %v105
    %v737 = vpop.f32.mrf.mxu0
    %v738 = vadd.f32 %v715, %v737
    %739 = vdwg.mxu0
    %740 = vmatpush.xpose.msra.mxu0 0.0
    %741 = vmatpush.xpose.msra.mxu0 0.0
    %742 = vmatpush.xpose.msra.mxu0 0.0
    %743 = vmatpush.xpose.msra.mxu0 0.0
    %744 = vmatpush.xpose.msra.mxu0 0.0
    %745 = vmatpush.xpose.msra.mxu0 0.0
    %746 = vmatpush.xpose.msra.mxu0 0.0
    %747 = vmatpush.xpose.msra.mxu0 0.0
    %748 = vmatpush.xpose.msra.mxu0 0.0
    %749 = vmatpush.xpose.msra.mxu0 0.0
    %750 = vmatpush.xpose.msra.mxu0 0.0
    %751 = vmatpush.xpose.msra.mxu0 0.0
    %752 = vmatpush.xpose.msra.mxu0 0.0
    %753 = vmatpush.xpose.msra.mxu0 0.0
    %754 = vmatpush.xpose.msra.mxu0 0.0
    %755 = vmatpush.xpose.msra.mxu0 %v138
    %756 = vmatmul.f32.gmra.mxu0 %v74
    %v757 = vpop.f32.mrf.mxu0
    %v758 = vadd.f32 %v735, %v757
    %759 = vmatmul.f32.gmra.mxu0 %v106
    %v760 = vpop.f32.mrf.mxu0
    %v761 = vadd.f32 %v738, %v760
    %762 = vdwg.mxu0
    %763 = vmatpush.xpose.msra.mxu0 0.0
    %764 = vmatpush.xpose.msra.mxu0 0.0
    %765 = vmatpush.xpose.msra.mxu0 0.0
    %766 = vmatpush.xpose.msra.mxu0 0.0
    %767 = vmatpush.xpose.msra.mxu0 0.0
    %768 = vmatpush.xpose.msra.mxu0 0.0
    %769 = vmatpush.xpose.msra.mxu0 0.0
    %770 = vmatpush.xpose.msra.mxu0 0.0
    %771 = vmatpush.xpose.msra.mxu0 0.0
    %772 = vmatpush.xpose.msra.mxu0 0.0
    %773 = vmatpush.xpose.msra.mxu0 0.0
    %774 = vmatpush.xpose.msra.mxu0 0.0
    %775 = vmatpush.xpose.msra.mxu0 0.0
    %776 = vmatpush.xpose.msra.mxu0 0.0
    %777 = vmatpush.xpose.msra.mxu0 0.0
    %778 = vmatpush.xpose.msra.mxu0 %v139
    %779 = vmatmul.f32.gmra.mxu0 %v75
    %v780 = vpop.f32.mrf.mxu0
    %v781 = vadd.f32 %v758, %v780
    %782 = vmatmul.f32.gmra.mxu0 %v107
    %v783 = vpop.f32.mrf.mxu0
    %v784 = vadd.f32 %v761, %v783
    %785 = vdwg.mxu0
    %786 = vmatpush.xpose.msra.mxu0 0.0
    %787 = vmatpush.xpose.msra.mxu0 0.0
    %788 = vmatpush.xpose.msra.mxu0 0.0
    %789 = vmatpush.xpose.msra.mxu0 0.0
    %790 = vmatpush.xpose.msra.mxu0 0.0
    %791 = vmatpush.xpose.msra.mxu0 0.0
    %792 = vmatpush.xpose.msra.mxu0 0.0
    %793 = vmatpush.xpose.msra.mxu0 0.0
    %794 = vmatpush.xpose.msra.mxu0 0.0
    %795 = vmatpush.xpose.msra.mxu0 0.0
    %796 = vmatpush.xpose.msra.mxu0 0.0
    %797 = vmatpush.xpose.msra.mxu0 0.0
    %798 = vmatpush.xpose.msra.mxu0 0.0
    %799 = vmatpush.xpose.msra.mxu0 0.0
    %800 = vmatpush.xpose.msra.mxu0 0.0
    %801 = vmatpush.xpose.msra.mxu0 %v140
    %802 = vmatmul.f32.gmra.mxu0 %v76
    %v803 = vpop.f32.mrf.mxu0
    %v804 = vadd.f32 %v781, %v803
    %805 = vmatmul.f32.gmra.mxu0 %v108
    %v806 = vpop.f32.mrf.mxu0
    %v807 = vadd.f32 %v784, %v806
    %808 = vdwg.mxu0
    %809 = vmatpush.xpose.msra.mxu0 0.0
    %810 = vmatpush.xpose.msra.mxu0 0.0
    %811 = vmatpush.xpose.msra.mxu0 0.0
    %812 = vmatpush.xpose.msra.mxu0 0.0
    %813 = vmatpush.xpose.msra.mxu0 0.0
    %814 = vmatpush.xpose.msra.mxu0 0.0
    %815 = vmatpush.xpose.msra.mxu0 0.0
    %816 = vmatpush.xpose.msra.mxu0 0.0
    %817 = vmatpush.xpose.msra.mxu0 0.0
    %818 = vmatpush.xpose.msra.mxu0 0.0
    %819 = vmatpush.xpose.msra.mxu0 0.0
    %820 = vmatpush.xpose.msra.mxu0 0.0
    %821 = vmatpush.xpose.msra.mxu0 0.0
    %822 = vmatpush.xpose.msra.mxu0 0.0
    %823 = vmatpush.xpose.msra.mxu0 0.0
    %824 = vmatpush.xpose.msra.mxu0 %v141
    %825 = vmatmul.f32.gmra.mxu0 %v77
    %v826 = vpop.f32.mrf.mxu0
    %v827 = vadd.f32 %v804, %v826
    %828 = vmatmul.f32.gmra.mxu0 %v109
    %v829 = vpop.f32.mrf.mxu0
    %v830 = vadd.f32 %v807, %v829
    %831 = vdwg.mxu0
    %832 = vmatpush.xpose.msra.mxu0 0.0
    %833 = vmatpush.xpose.msra.mxu0 0.0
    %834 = vmatpush.xpose.msra.mxu0 0.0
    %835 = vmatpush.xpose.msra.mxu0 0.0
    %836 = vmatpush.xpose.msra.mxu0 0.0
    %837 = vmatpush.xpose.msra.mxu0 0.0
    %838 = vmatpush.xpose.msra.mxu0 0.0
    %839 = vmatpush.xpose.msra.mxu0 0.0
    %840 = vmatpush.xpose.msra.mxu0 0.0
    %841 = vmatpush.xpose.msra.mxu0 0.0
    %842 = vmatpush.xpose.msra.mxu0 0.0
    %843 = vmatpush.xpose.msra.mxu0 0.0
    %844 = vmatpush.xpose.msra.mxu0 0.0
    %845 = vmatpush.xpose.msra.mxu0 0.0
    %846 = vmatpush.xpose.msra.mxu0 0.0
    %847 = vmatpush.xpose.msra.mxu0 %v142
    %848 = vmatmul.f32.gmra.mxu0 %v78
    %v849 = vpop.f32.mrf.mxu0
    %v850 = vadd.f32 %v827, %v849
    %851 = vmatmul.f32.gmra.mxu0 %v110
    %v852 = vpop.f32.mrf.mxu0
    %v853 = vadd.f32 %v830, %v852
    %854 = vdwg.mxu0
    %855 = vmatpush.xpose.msra.mxu0 0.0
    %856 = vmatpush.xpose.msra.mxu0 0.0
    %857 = vmatpush.xpose.msra.mxu0 0.0
    %858 = vmatpush.xpose.msra.mxu0 0.0
    %859 = vmatpush.xpose.msra.mxu0 0.0
    %860 = vmatpush.xpose.msra.mxu0 0.0
    %861 = vmatpush.xpose.msra.mxu0 0.0
    %862 = vmatpush.xpose.msra.mxu0 0.0
    %863 = vmatpush.xpose.msra.mxu0 0.0
    %864 = vmatpush.xpose.msra.mxu0 0.0
    %865 = vmatpush.xpose.msra.mxu0 0.0
    %866 = vmatpush.xpose.msra.mxu0 0.0
    %867 = vmatpush.xpose.msra.mxu0 0.0
    %868 = vmatpush.xpose.msra.mxu0 0.0
    %869 = vmatpush.xpose.msra.mxu0 0.0
    %870 = vmatpush.xpose.msra.mxu0 %v143
    %871 = vmatmul.f32.gmra.mxu0 %v79
    %v872 = vpop.f32.mrf.mxu0
    %v873 = vadd.f32 %v850, %v872
    %874 = vmatmul.f32.gmra.mxu0 %v111
    %v875 = vpop.f32.mrf.mxu0
    %v876 = vadd.f32 %v853, %v875
    %877 = vdwg.mxu0
    %878 = vmatpush.xpose.msra.mxu0 0.0
    %879 = vmatpush.xpose.msra.mxu0 0.0
    %880 = vmatpush.xpose.msra.mxu0 0.0
    %881 = vmatpush.xpose.msra.mxu0 0.0
    %882 = vmatpush.xpose.msra.mxu0 0.0
    %883 = vmatpush.xpose.msra.mxu0 0.0
    %884 = vmatpush.xpose.msra.mxu0 0.0
    %885 = vmatpush.xpose.msra.mxu0 0.0
    %886 = vmatpush.xpose.msra.mxu0 0.0
    %887 = vmatpush.xpose.msra.mxu0 0.0
    %888 = vmatpush.xpose.msra.mxu0 0.0
    %889 = vmatpush.xpose.msra.mxu0 0.0
    %890 = vmatpush.xpose.msra.mxu0 0.0
    %891 = vmatpush.xpose.msra.mxu0 0.0
    %892 = vmatpush.xpose.msra.mxu0 0.0
    %893 = vmatpush.xpose.msra.mxu0 %v163
    %894 = vmatmul.f32.gmra.mxu0 %v157
    %v895 = vpop.f32.mrf.mxu0
    %v896 = vadd.f32 %v873, %v895
    %897 = vmatmul.f32.gmra.mxu0 %v160
    %v898 = vpop.f32.mrf.mxu0
    %v899 = vadd.f32 %v876, %v898
    %900 = vdwg.mxu0
    %v901 = vsub.f32 0.0, %v896
    %v902 = vsub.f32 0.0, %v899
    %v903 = vmul.f32 %v901, 1.442695
    %v904 = vpow.pop %v903
    %v905 = vmul.f32 %v902, 1.442695
    %v906 = vpow.pop %v905
    %v907 = vadd.f32 %v904, 1.0
    %v908 = vadd.f32 %v906, 1.0
    %v909 = vrcp.pop %v907
    %v910 = vmul.f32 %v907, %v909
    %v911 = vsub.f32 1.0, %v910
    %v912 = vmul.f32 %v909, %v911
    %v913 = vadd.f32 %v909, %v912
    %vm914 = vweird.f32 %v907
    %vm915 = vweird.f32 %v909
    %vm916 = vmor %vm914, %vm915
    %v917 = vsel %vm916, %v909, %v913
    %v918 = vand.u32 2147483647, %v907
    %vm919 = vcmp.eq.f32.partialorder %v918, 8.507059e+37
    %v920 = vand.u32 %v907, 2147483648
    %v921 = vor.u32 1.1754944e-38, %v920
    %v922 = vsel %vm919, %v921, %v917
    %v923 = vmul.f32 1.0, %v922
    %v924 = vrcp.pop %v908
    %v925 = vmul.f32 %v908, %v924
    %v926 = vsub.f32 1.0, %v925
    %v927 = vmul.f32 %v924, %v926
    %v928 = vadd.f32 %v924, %v927
    %vm929 = vweird.f32 %v908
    %vm930 = vweird.f32 %v924
    %vm931 = vmor %vm929, %vm930
    %v932 = vsel %vm931, %v924, %v928
    %v933 = vand.u32 2147483647, %v908
    %vm934 = vcmp.eq.f32.partialorder %v933, 8.507059e+37
    %v935 = vand.u32 %v908, 2147483648
    %v936 = vor.u32 1.1754944e-38, %v935
    %v937 = vsel %vm934, %v936, %v932
    %v938 = vmul.f32 1.0, %v937
    %v939 = vld [vmem:[%s3] sm:$0x3]
    %940 = vset.pattern.permute.xlu0 1
    %941 = vperm.xlu0 %940, %v47
    %v942 = vpop.permute.xlu0 %941
    %vm944 = vcmask 80896
    %v946 = vsel %vm944, %v939, 0
    %vm948 = vcmask 1041408
    %v950 = vsel %vm948, %v938, 0
    %952 = vmatpush.msra.mxu0 0.0
    %953 = vmatpush.msra.mxu0 0.0
    %954 = vmatpush.msra.mxu0 0.0
    %955 = vmatpush.msra.mxu0 0.0
    %956 = vmatpush.msra.mxu0 0.0
    %957 = vmatpush.msra.mxu0 0.0
    %958 = vmatpush.msra.mxu0 0.0
    %959 = vmatpush.msra.mxu0 0.0
    %960 = vmatpush.msra.mxu0 0.0
    %961 = vmatpush.msra.mxu0 0.0
    %962 = vmatpush.msra.mxu0 0.0
    %963 = vmatpush.msra.mxu0 0.0
    %964 = vmatpush.msra.mxu0 0.0
    %965 = vmatpush.msra.mxu0 0.0
    %966 = vmatpush.msra.mxu0 %v950
    %967 = vmatpush.msra.mxu0 %v923
    %968 = vmatmul.f32.gmra.mxu0 %v946
    %v969 = vpop.f32.mrf.mxu0
    %v970 = vadd.f32 %v942, %v969
    %971 = vdwg.mxu0
    %vm972 = vcmask 58368
    %v973 = vsel %vm972, %v970, -inf
    %v974 = vrot.slane %v973, 4
    %v975 = vmax.f32 %v973, %v974
    %v976 = vrot.slane %v975, 2
    %v977 = vmax.f32 %v975, %v976
    %v978 = vrot.slane %v977, 1
    %v979 = vmax.f32 %v977, %v978
    %v980 = vsub.f32 %v970, %v979
    %v981 = vmul.f32 %v980, 1.442695
    %v982 = vpow.pop %v981
    %v983 = vsel %vm972, %v982, 0.0
    %v984 = vrot.slane %v983, 4
    %v985 = vadd.f32 %v983, %v984
    %v986 = vrot.slane %v985, 2
    %v987 = vadd.f32 %v985, %v986
    %v988 = vrot.slane %v987, 1
    %v989 = vadd.f32 %v987, %v988
    %v990 = vrcp.pop %v989
    %v991 = vmul.f32 %v989, %v990
    %v992 = vsub.f32 1.0, %v991
    %v993 = vmul.f32 %v990, %v992
    %v994 = vadd.f32 %v990, %v993
    %vm995 = vweird.f32 %v989
    %vm996 = vweird.f32 %v990
    %vm997 = vmor %vm995, %vm996
    %v998 = vsel %vm997, %v990, %v994
    %v999 = vand.u32 2147483647, %v989
    %vm1000 = vcmp.eq.f32.partialorder %v999, 8.507059e+37
    %v1001 = vand.u32 %v989, 2147483648
    %v1002 = vor.u32 1.1754944e-38, %v1001
    %v1003 = vsel %vm1000, %v1002, %v998
    %v1004 = vmul.f32 %v982, %v1003
    %1005 = vxpose.xlu0.b32.start [1/16] %v1004, 128
    %1006 = vxpose.xlu0.b32.cont [2/16] 0.0, 128
    %1007 = vxpose.xlu0.b32.cont [3/16] 0.0, 128
    %1008 = vxpose.xlu0.b32.cont [4/16] 0.0, 128
    %1009 = vxpose.xlu0.b32.cont [5/16] 0.0, 128
    %1010 = vxpose.xlu0.b32.cont [6/16] 0.0, 128
    %1011 = vxpose.xlu0.b32.cont [7/16] 0.0, 128
    %1012 = vxpose.xlu0.b32.cont [8/16] 0.0, 128
    %1013 = vxpose.xlu0.b32.cont [9/16] 0.0, 128
    %1014 = vxpose.xlu0.b32.cont [10/16] 0.0, 128
    %1015 = vxpose.xlu0.b32.cont [11/16] 0.0, 128
    %1016 = vxpose.xlu0.b32.cont [12/16] 0.0, 128
    %1017 = vxpose.xlu0.b32.cont [13/16] 0.0, 128
    %1018 = vxpose.xlu0.b32.cont [14/16] 0.0, 128
    %1019 = vxpose.xlu0.b32.cont [15/16] 0.0, 128
    %1020 = vxpose.xlu0.b32.end [16/16] 0.0, 128
    %v1021 = vpop.trf.xlu0
    %v1022 = vpop.trf.xlu0
    %v1023 = vpop.trf.xlu0
    %v1024 = vpop.trf.xlu0
    %v1025 = vpop.trf.xlu0
    %v1026 = vpop.trf.xlu0
    %v1027 = vpop.trf.xlu0
    %v1028 = vpop.trf.xlu0
    %v1029 = vpop.trf.xlu0
    %v1030 = vpop.trf.xlu0
    %v1031 = vpop.trf.xlu0
    %v1032 = vpop.trf.xlu0
    %v1033 = vpop.trf.xlu0
    %v1034 = vpop.trf.xlu0
    %v1035 = vpop.trf.xlu0
    %v1036 = vpop.trf.xlu0
    %vm1037 = vcmask 15360
    %1038 = vst.msk [vmem:[%s4] sm:$0xff] %vm1037, %v1021
    // Predicated region
    $region26: #{tpu_custom_call.1} parent=1 // pred_check
      _
    $region27: #{tpu_custom_call.1} parent=1 // pred_check_branch
      %1040 = sbr.rel (0) target = $region29
    $region28: #{tpu_custom_call.1} parent=1 // pred_region
      _
    $region29: #{tpu_custom_call.1} parent=1 // pred_fallthru
      _
    // Predicated region
    $region30: #{tpu_custom_call.1} parent=1 // pred_check
      _
    $region31: #{tpu_custom_call.1} parent=1 // pred_check_branch
      %1042 = sbr.rel (0) target = $region33
    $region32: #{tpu_custom_call.1} parent=1 // pred_region
      _
    $region33: #{tpu_custom_call.1} parent=1 // pred_fallthru
      _
    %1043 = vsyncpa [#allocation3], 1
    %1044 = vsyncpa [#allocation5], 1

</llo_original>
